<compile_context>
chip_gen: v6e
topology: v6e:2x2x1
jax: 0.10.0
libtpu: 0.0.40
codegen_flags: <defaults>
</compile_context>

<pallas_src>
import math

import jax
import jax.numpy as jnp
import numpy as np
from jax import lax
from jax.experimental import pallas as pl
from jax.experimental.pallas import tpu as pltpu

# ---- problem sizes (small, consistent with the module) ----------------------
B, N, C = 2, 8, 32
NUM_HEADS = 4
HEAD_DIM = C // NUM_HEADS
MLP_HIDDEN = int(C * 4.0)           # mlp_ratio = 4.0
EPS = 1e-5                          # nn.LayerNorm default eps
SCALE = HEAD_DIM ** (-0.5)          # qk_scale=None -> head_dim ** -0.5
BN = B * N

# weight-slab column layout: [wq*SCALE | wk | wv | wp | w1 | head_mask]
WQKV_OFF = 0
WP_OFF = 3 * C
W1_OFF = 4 * C
HM_OFF = 8 * C
WSLAB_COLS = 8 * C + NUM_HEADS      # 260 lanes (bf16)

# vector-slab row layout (f32, lanes = MLP_HIDDEN):
#   0:g1  1:be1  2:bp  3:g2  4:be2  5:b2  (first C lanes)
#   6:b1 (all MLP_HIDDEN lanes)
#   8..8+NUM_HEADS: head_mask^T (first C lanes)
VEC_ROWS = 16


# ---- in-kernel math helpers --------------------------------------------------
def _erf(x):
    # Abramowitz & Stegun 7.1.26 rational approximation (|err| < 1.5e-7).
    a1, a2, a3, a4, a5 = 0.254829592, -0.284496736, 1.421413741, -1.453152027, 1.061405429
    p = 0.3275911
    sign = jnp.where(x >= 0.0, 1.0, -1.0)
    ax = jnp.abs(x)
    # divide -> approx reciprocal on the (otherwise idle) EUP slot
    t = pl.reciprocal(1.0 + p * ax, approx=True)
    poly = ((((a5 * t + a4) * t + a3) * t + a2) * t + a1) * t
    return sign * (1.0 - poly * jnp.exp(-ax * ax))


def _gelu_exact(x):
    # nn.GELU default = exact (erf-based) GELU.
    return 0.5 * x * (1.0 + _erf(x * (1.0 / math.sqrt(2.0))))


def _layernorm(x, gamma, beta):
    mean = jnp.mean(x, axis=-1, keepdims=True)
    xc = x - mean
    var = jnp.mean(xc * xc, axis=-1, keepdims=True)
    return xc * lax.rsqrt(var + EPS) * gamma + beta


def _bf16(x):
    return x.astype(jnp.bfloat16)


# ---- the kernel: whole batch in a single grid step ----------------------------
def cross_attn_block_kernel(
    x_ref,        # (B, N, C)        f32
    w_ref,        # (C, WSLAB_COLS)  bf16  fused [wq*s | wk | wv | wp | w1 | hm]
    w2_ref,       # (MLP_HIDDEN, C)  bf16
    vec_ref,      # (VEC_ROWS, MLP_HIDDEN) f32 packed vectors + head_mask^T
    o_ref,        # (B, C)
):
    f32 = jnp.float32
    x3 = x_ref[...].astype(f32)                                   # (B, N, C)
    x2 = x3.reshape(BN, C)                                        # (BN, C)

    # unpack the packed parameter slabs (static slices)
    g1 = vec_ref[0:1, 0:C]
    be1 = vec_ref[1:2, 0:C]
    bp = vec_ref[2:3, 0:C]
    g2 = vec_ref[3:4, 0:C]
    be2 = vec_ref[4:5, 0:C]
    b2 = vec_ref[5:6, 0:C]
    b1 = vec_ref[6:7, :]                                          # (1, MLP_HIDDEN)
    hm_t = vec_ref[8:8 + NUM_HEADS, 0:C]                          # (H, C) f32

    wqkv = w_ref[:, WQKV_OFF:WP_OFF]                              # (C, 3C) bf16, SCALE folded into Q
    wp = w_ref[:, WP_OFF:W1_OFF]                                  # (C, C)  bf16
    w1 = w_ref[:, W1_OFF:HM_OFF]                                  # (C, 4C) bf16
    hm = w_ref[:, HM_OFF:HM_OFF + NUM_HEADS].astype(f32)          # (C, H)  exact 0/1

    # norm1 (f32 elementwise math throughout; only MXU operands go bf16)
    xn = _layernorm(x2, g1, be1)

    # fused Q/K/V projection: one MXU push for all tokens and all three mats.
    # TODO(synk): at real N, split into wkv over BN rows + wq over the B CLS rows only.
    qkv = jnp.dot(_bf16(xn), wqkv, preferred_element_type=f32)    # (BN, 3C)
    q = qkv[:, 0:C]                                               # already scaled by SCALE
    k = qkv[:, C:2 * C]
    v = qkv[:, 2 * C:3 * C]

    # per-head scores for all batches/heads at once:
    #   scores[b*N+n, h] = sum_{c in head h} (scale*q_cls[b, c]) * k[b*N+n, c]
    q_cls = q.reshape(B, N, C)[:, 0:1, :]                         # (B, 1, C) CLS queries
    k3 = k.reshape(B, N, C)
    prod = (q_cls * k3).reshape(BN, C)                            # broadcast over N, f32
    scores = jnp.dot(prod, hm, preferred_element_type=f32)        # (BN, H), f32 MXU op

    # softmax over the N keys of each batch (grouped sublane reduce)
    s3 = scores.reshape(B, N, NUM_HEADS)
    m = jnp.max(s3, axis=1, keepdims=True)
    e = jnp.exp(s3 - m)
    denom = jnp.sum(e, axis=1, keepdims=True)
    p = (e * pl.reciprocal(denom, approx=True)).reshape(BN, NUM_HEADS)    # (BN, H)

    # expand per-head weights over their HEAD_DIM lanes, weight V, reduce over N
    p_exp = jnp.dot(p, hm_t, preferred_element_type=f32)          # (BN, C), f32 MXU op
    attn = jnp.sum((p_exp * v).reshape(B, N, C), axis=1)          # (B, C)

    # output projection
    attn = jnp.dot(_bf16(attn), wp, preferred_element_type=f32) + bp      # (B, C)

    # residual with the raw CLS token
    x_cls = x3[:, 0, :]                                           # (B, C)
    x1 = x_cls + attn

    # MLP branch (has_mlp=True)
    x1n = _layernorm(x1, g2, be2)                                 # norm2
    hid = jnp.dot(_bf16(x1n), w1, preferred_element_type=f32) + b1        # (B, 4C)
    hid = _gelu_exact(hid)
    y = jnp.dot(_bf16(hid), w2_ref[...], preferred_element_type=f32) + b2 # (B, C)

    o_ref[...] = (x1 + y).astype(o_ref.dtype)


# ---- one-time host-side parameter packing (NOT in the per-call hot path) ------
def prepare_params(params):
    g1, be1, wq, wk, wv, wp, bp, g2, be2, w1, b1, w2, b2 = params

    # one-hot head masks (exact in bf16/f32)
    lane = np.arange(C)[:, None]
    head = np.arange(NUM_HEADS)[None, :]
    head_mask = (lane // HEAD_DIM == head).astype(np.float32)     # (C, H)

    # fused bf16 weight slab; attention scale folded into the Q columns
    wslab = jnp.concatenate(
        [wq * SCALE, wk, wv, wp, w1, jnp.asarray(head_mask)], axis=1
    ).astype(jnp.bfloat16)                                        # (C, WSLAB_COLS)

    # packed f32 vector slab
    vec = np.zeros((VEC_ROWS, MLP_HIDDEN), np.float32)
    vec[0, :C] = np.asarray(g1)[0]
    vec[1, :C] = np.asarray(be1)[0]
    vec[2, :C] = np.asarray(bp)[0]
    vec[3, :C] = np.asarray(g2)[0]
    vec[4, :C] = np.asarray(be2)[0]
    vec[5, :C] = np.asarray(b2)[0]
    vec[6, :] = np.asarray(b1)[0]
    vec[8:8 + NUM_HEADS, :C] = head_mask.T
    vec = jnp.asarray(vec)

    return wslab, w2.astype(jnp.bfloat16), vec


# ---- wrapper ------------------------------------------------------------------
def cross_attention_block(x, prepped):
    wslab, w2b, vec = prepped

    def full(shape):
        return pl.BlockSpec(shape, lambda i, _n=len(shape): (0,) * _n)

    out = pl.pallas_call(
        cross_attn_block_kernel,
        out_shape=jax.ShapeDtypeStruct((B, C), x.dtype),
        grid=(1,),
        in_specs=[
            full((B, N, C)),                      # x (whole batch, one step)
            full((C, WSLAB_COLS)),                # fused weight slab
            full((MLP_HIDDEN, C)),                # fc2 weight
            full((VEC_ROWS, MLP_HIDDEN)),         # packed vectors + head_mask^T
        ],
        out_specs=full((B, C)),
        compiler_params=pltpu.CompilerParams(dimension_semantics=("arbitrary",)),
    )(x, wslab, w2b, vec)
    return out.reshape(B, 1, C)


# ---- deterministic parameter init ---------------------------------------------
def init_params(key):
    ks = jax.random.split(key, 12)
    w = lambda k, shape, s=0.05: jax.random.normal(k, shape, jnp.float32) * s
    g1 = 1.0 + w(ks[0], (1, C), 0.1)
    be1 = w(ks[1], (1, C), 0.1)
    wq = w(ks[2], (C, C))
    wk = w(ks[3], (C, C))
    wv = w(ks[4], (C, C))
    wp = w(ks[5], (C, C))
    bp = w(ks[6], (1, C), 0.02)
    g2 = 1.0 + w(ks[7], (1, C), 0.1)
    be2 = w(ks[8], (1, C), 0.1)
    w1 = w(ks[9], (C, MLP_HIDDEN))
    b1 = w(ks[10], (1, MLP_HIDDEN), 0.02)
    w2 = w(ks[11], (MLP_HIDDEN, C))
    b2 = jnp.zeros((1, C), jnp.float32)
    return (g1, be1, wq, wk, wv, wp, bp, g2, be2, w1, b1, w2, b2)


# ---- pure-JAX reference (mirrors the PyTorch forward) ---------------------------
def reference(x, params):
    g1, be1, wq, wk, wv, wp, bp, g2, be2, w1, b1, w2, b2 = params

    def ln(t, g, b):
        m = jnp.mean(t, -1, keepdims=True)
        v = jnp.mean((t - m) ** 2, -1, keepdims=True)
        return (t - m) / jnp.sqrt(v + EPS) * g + b

    xn = ln(x, g1, be1)
    q = (xn[:, 0:1] @ wq).reshape(B, 1, NUM_HEADS, HEAD_DIM).transpose(0, 2, 1, 3)
    k = (xn @ wk).reshape(B, N, NUM_HEADS, HEAD_DIM).transpose(0, 2, 1, 3)
    v = (xn @ wv).reshape(B, N, NUM_HEADS, HEAD_DIM).transpose(0, 2, 1, 3)
    attn = jax.nn.softmax((q @ jnp.swapaxes(k, -2, -1)) * SCALE, axis=-1)
    o = (attn @ v).transpose(0, 2, 1, 3).reshape(B, 1, C)
    o = o @ wp + bp
    x1 = x[:, 0:1] + o
    x1n = ln(x1, g2, be2)
    h = jax.nn.gelu(x1n @ w1 + b1, approximate=False)
    return x1 + h @ w2 + b2


if __name__ == "__main__":
    key = jax.random.PRNGKey(0)
    kx, kp = jax.random.split(key)
    x = jax.random.normal(kx, (B, N, C), jnp.float32)
    params = init_params(kp)

    # one-time weight packing (outside the forward hot path)
    prepped = prepare_params(params)
    prepped = tuple(jax.block_until_ready(p) for p in prepped)

    out = cross_attention_block(x, prepped)
    out = jax.block_until_ready(out)

    ref = reference(x, params)
    assert out.shape == (B, 1, C), out.shape
    if not np.allclose(np.asarray(out), np.asarray(ref), rtol=1e-2, atol=1e-2):
        raise SystemExit("kernel/reference mismatch")
    print("KERNEL_OK")
</pallas_src>

<mosaic_0001>
module attributes {stable_mosaic.version = 11 : i64} {
  func.func @cross_attn_block_kernel(%arg0: i32, %arg1: memref<2x8x32xf32, #tpu.memory_space<vmem>>, %arg2: memref<32x260xbf16, #tpu.memory_space<vmem>>, %arg3: memref<128x32xbf16, #tpu.memory_space<vmem>>, %arg4: memref<16x128xf32, #tpu.memory_space<vmem>>, %arg5: memref<2x32xf32, #tpu.memory_space<vmem>>) attributes {dimension_semantics = [#tpu.dimension_semantics<arbitrary>], iteration_bounds = array<i64: 1>, scalar_prefetch = 0 : i64, scratch_operands = 0 : i64, tpu.core_type = #tpu.core_type<tc>, window_params = [{pipeline_mode = #tpu.pipeline_mode<synchronous>, transform_indices = @transform_0, window_bounds = array<i64: 2, 8, 32>}, {pipeline_mode = #tpu.pipeline_mode<synchronous>, transform_indices = @transform_1, window_bounds = array<i64: 32, 260>}, {pipeline_mode = #tpu.pipeline_mode<synchronous>, transform_indices = @transform_2, window_bounds = array<i64: 128, 32>}, {pipeline_mode = #tpu.pipeline_mode<synchronous>, transform_indices = @transform_3, window_bounds = array<i64: 16, 128>}, {pipeline_mode = #tpu.pipeline_mode<synchronous>, transform_indices = @transform_4, window_bounds = array<i64: 2, 32>}]} {
    %c0 = arith.constant 0 : index
    %c0_0 = arith.constant 0 : index
    %c0_1 = arith.constant 0 : index
    %0 = vector.load %arg1[%c0, %c0_0, %c0_1] : memref<2x8x32xf32, #tpu.memory_space<vmem>>, vector<2x8x32xf32>
    %1 = vector.shape_cast %0 : vector<2x8x32xf32> to vector<16x32xf32>
    %c0_2 = arith.constant 0 : index
    %c0_3 = arith.constant 0 : index
    %2 = vector.load %arg4[%c0_2, %c0_3] : memref<16x128xf32, #tpu.memory_space<vmem>>, vector<1x32xf32>
    %c1 = arith.constant 1 : index
    %c0_4 = arith.constant 0 : index
    %3 = vector.load %arg4[%c1, %c0_4] : memref<16x128xf32, #tpu.memory_space<vmem>>, vector<1x32xf32>
    %c2 = arith.constant 2 : index
    %c0_5 = arith.constant 0 : index
    %4 = vector.load %arg4[%c2, %c0_5] : memref<16x128xf32, #tpu.memory_space<vmem>>, vector<1x32xf32>
    %c3 = arith.constant 3 : index
    %c0_6 = arith.constant 0 : index
    %5 = vector.load %arg4[%c3, %c0_6] : memref<16x128xf32, #tpu.memory_space<vmem>>, vector<1x32xf32>
    %c4 = arith.constant 4 : index
    %c0_7 = arith.constant 0 : index
    %6 = vector.load %arg4[%c4, %c0_7] : memref<16x128xf32, #tpu.memory_space<vmem>>, vector<1x32xf32>
    %c5 = arith.constant 5 : index
    %c0_8 = arith.constant 0 : index
    %7 = vector.load %arg4[%c5, %c0_8] : memref<16x128xf32, #tpu.memory_space<vmem>>, vector<1x32xf32>
    %c6 = arith.constant 6 : index
    %c0_9 = arith.constant 0 : index
    %8 = vector.load %arg4[%c6, %c0_9] : memref<16x128xf32, #tpu.memory_space<vmem>>, vector<1x128xf32>
    %c8 = arith.constant 8 : index
    %c0_10 = arith.constant 0 : index
    %9 = vector.load %arg4[%c8, %c0_10] : memref<16x128xf32, #tpu.memory_space<vmem>>, vector<4x32xf32>
    %c0_11 = arith.constant 0 : index
    %c0_12 = arith.constant 0 : index
    %10 = vector.load %arg2[%c0_11, %c0_12] : memref<32x260xbf16, #tpu.memory_space<vmem>>, vector<32x96xbf16>
    %c0_13 = arith.constant 0 : index
    %c96 = arith.constant 96 : index
    %11 = vector.load %arg2[%c0_13, %c96] : memref<32x260xbf16, #tpu.memory_space<vmem>>, vector<32x32xbf16>
    %c0_14 = arith.constant 0 : index
    %c128 = arith.constant 128 : index
    %12 = vector.load %arg2[%c0_14, %c128] : memref<32x260xbf16, #tpu.memory_space<vmem>>, vector<32x128xbf16>
    %c0_15 = arith.constant 0 : index
    %c256 = arith.constant 256 : index
    %13 = vector.load %arg2[%c0_15, %c256] : memref<32x260xbf16, #tpu.memory_space<vmem>>, vector<32x4xbf16>
    %14 = arith.extf %13 : vector<32x4xbf16> to vector<32x4xf32>
    %cst = arith.constant dense<0.000000e+00> : vector<16xf32>
    %15 = vector.multi_reduction <add>, %1, %cst [1] : vector<16x32xf32> to vector<16xf32>
    %16 = vector.shape_cast %15 : vector<16xf32> to vector<16x1xf32>
    %cst_16 = arith.constant 3.200000e+01 : f32
    %17 = vector.broadcast %cst_16 : f32 to vector<16x1xf32>
    %18 = arith.divf %16, %17 : vector<16x1xf32>
    %19 = vector.broadcast %18 : vector<16x1xf32> to vector<16x32xf32>
    %20 = arith.subf %1, %19 : vector<16x32xf32>
    %21 = arith.mulf %20, %20 : vector<16x32xf32>
    %cst_17 = arith.constant dense<0.000000e+00> : vector<16xf32>
    %22 = vector.multi_reduction <add>, %21, %cst_17 [1] : vector<16x32xf32> to vector<16xf32>
    %23 = vector.shape_cast %22 : vector<16xf32> to vector<16x1xf32>
    %cst_18 = arith.constant 3.200000e+01 : f32
    %24 = vector.broadcast %cst_18 : f32 to vector<16x1xf32>
    %25 = arith.divf %23, %24 : vector<16x1xf32>
    %cst_19 = arith.constant 9.99999974E-6 : f32
    %26 = vector.broadcast %cst_19 : f32 to vector<16x1xf32>
    %27 = arith.addf %25, %26 : vector<16x1xf32>
    %28 = math.rsqrt %27 : vector<16x1xf32>
    %29 = vector.broadcast %28 : vector<16x1xf32> to vector<16x32xf32>
    %30 = arith.mulf %20, %29 : vector<16x32xf32>
    %31 = vector.broadcast %2 : vector<1x32xf32> to vector<16x32xf32>
    %32 = arith.mulf %30, %31 : vector<16x32xf32>
    %33 = vector.broadcast %3 : vector<1x32xf32> to vector<16x32xf32>
    %34 = arith.addf %32, %33 : vector<16x32xf32>
    %35 = arith.truncf %34 : vector<16x32xf32> to vector<16x32xbf16>
    %cst_20 = arith.constant dense<0.000000e+00> : vector<16x96xf32>
    %36 = tpu.matmul %35, %10, %cst_20 {dimension_numbers = #tpu.dot_dimension_numbers<[1], [0], [0], [1], [0, 0, 1, 1], [], []>} : vector<16x32xbf16>, vector<32x96xbf16>, vector<16x96xf32> -> vector<16x96xf32>
    %37 = vector.extract_strided_slice %36 {offsets = [0, 0], sizes = [16, 32], strides = [1, 1]} : vector<16x96xf32> to vector<16x32xf32>
    %38 = vector.extract_strided_slice %36 {offsets = [0, 32], sizes = [16, 32], strides = [1, 1]} : vector<16x96xf32> to vector<16x32xf32>
    %39 = vector.extract_strided_slice %36 {offsets = [0, 64], sizes = [16, 32], strides = [1, 1]} : vector<16x96xf32> to vector<16x32xf32>
    %40 = vector.shape_cast %37 : vector<16x32xf32> to vector<2x8x32xf32>
    %41 = vector.extract_strided_slice %40 {offsets = [0, 0, 0], sizes = [2, 1, 32], strides = [1, 1, 1]} : vector<2x8x32xf32> to vector<2x1x32xf32>
    %42 = vector.shape_cast %38 : vector<16x32xf32> to vector<2x8x32xf32>
    %43 = vector.broadcast %41 : vector<2x1x32xf32> to vector<2x8x32xf32>
    %44 = arith.mulf %43, %42 : vector<2x8x32xf32>
    %45 = vector.shape_cast %44 : vector<2x8x32xf32> to vector<16x32xf32>
    %cst_21 = arith.constant dense<0.000000e+00> : vector<16x4xf32>
    %46 = tpu.matmul %45, %14, %cst_21 {dimension_numbers = #tpu.dot_dimension_numbers<[1], [0], [0], [1], [0, 0, 1, 1], [], []>} : vector<16x32xf32>, vector<32x4xf32>, vector<16x4xf32> -> vector<16x4xf32>
    %47 = vector.shape_cast %46 : vector<16x4xf32> to vector<2x8x4xf32>
    %cst_22 = arith.constant dense<0xFF800000> : vector<2x4xf32>
    %48 = vector.multi_reduction <maximumf>, %47, %cst_22 [1] : vector<2x8x4xf32> to vector<2x4xf32>
    %49 = vector.shape_cast %48 : vector<2x4xf32> to vector<2x1x4xf32>
    %50 = vector.broadcast %49 : vector<2x1x4xf32> to vector<2x8x4xf32>
    %51 = arith.subf %47, %50 : vector<2x8x4xf32>
    %52 = math.exp %51 : vector<2x8x4xf32>
    %cst_23 = arith.constant dense<0.000000e+00> : vector<2x4xf32>
    %53 = vector.multi_reduction <add>, %52, %cst_23 [1] : vector<2x8x4xf32> to vector<2x4xf32>
    %54 = vector.shape_cast %53 : vector<2x4xf32> to vector<2x1x4xf32>
    %55 = tpu.reciprocal %54 {approx = true} : vector<2x1x4xf32> -> vector<2x1x4xf32>
    %56 = vector.broadcast %55 : vector<2x1x4xf32> to vector<2x8x4xf32>
    %57 = arith.mulf %52, %56 : vector<2x8x4xf32>
    %58 = vector.shape_cast %57 : vector<2x8x4xf32> to vector<16x4xf32>
    %cst_24 = arith.constant dense<0.000000e+00> : vector<16x32xf32>
    %59 = tpu.matmul %58, %9, %cst_24 {dimension_numbers = #tpu.dot_dimension_numbers<[1], [0], [0], [1], [0, 0, 1, 1], [], []>} : vector<16x4xf32>, vector<4x32xf32>, vector<16x32xf32> -> vector<16x32xf32>
    %60 = arith.mulf %59, %39 : vector<16x32xf32>
    %61 = vector.shape_cast %60 : vector<16x32xf32> to vector<2x8x32xf32>
    %cst_25 = arith.constant dense<0.000000e+00> : vector<2x32xf32>
    %62 = vector.multi_reduction <add>, %61, %cst_25 [1] : vector<2x8x32xf32> to vector<2x32xf32>
    %63 = arith.truncf %62 : vector<2x32xf32> to vector<2x32xbf16>
    %cst_26 = arith.constant dense<0.000000e+00> : vector<2x32xf32>
    %64 = tpu.matmul %63, %11, %cst_26 {dimension_numbers = #tpu.dot_dimension_numbers<[1], [0], [0], [1], [0, 0, 1, 1], [], []>} : vector<2x32xbf16>, vector<32x32xbf16>, vector<2x32xf32> -> vector<2x32xf32>
    %65 = vector.broadcast %4 : vector<1x32xf32> to vector<2x32xf32>
    %66 = arith.addf %64, %65 : vector<2x32xf32>
    %67 = vector.extract_strided_slice %0 {offsets = [0, 0, 0], sizes = [2, 1, 32], strides = [1, 1, 1]} : vector<2x8x32xf32> to vector<2x1x32xf32>
    %68 = vector.shape_cast %67 : vector<2x1x32xf32> to vector<2x32xf32>
    %69 = arith.addf %68, %66 : vector<2x32xf32>
    %cst_27 = arith.constant dense<0.000000e+00> : vector<2xf32>
    %70 = vector.multi_reduction <add>, %69, %cst_27 [1] : vector<2x32xf32> to vector<2xf32>
    %71 = vector.shape_cast %70 : vector<2xf32> to vector<2x1xf32>
    %cst_28 = arith.constant 3.200000e+01 : f32
    %72 = vector.broadcast %cst_28 : f32 to vector<2x1xf32>
    %73 = arith.divf %71, %72 : vector<2x1xf32>
    %74 = vector.broadcast %73 : vector<2x1xf32> to vector<2x32xf32>
    %75 = arith.subf %69, %74 : vector<2x32xf32>
    %76 = arith.mulf %75, %75 : vector<2x32xf32>
    %cst_29 = arith.constant dense<0.000000e+00> : vector<2xf32>
    %77 = vector.multi_reduction <add>, %76, %cst_29 [1] : vector<2x32xf32> to vector<2xf32>
    %78 = vector.shape_cast %77 : vector<2xf32> to vector<2x1xf32>
    %cst_30 = arith.constant 3.200000e+01 : f32
    %79 = vector.broadcast %cst_30 : f32 to vector<2x1xf32>
    %80 = arith.divf %78, %79 : vector<2x1xf32>
    %cst_31 = arith.constant 9.99999974E-6 : f32
    %81 = vector.broadcast %cst_31 : f32 to vector<2x1xf32>
    %82 = arith.addf %80, %81 : vector<2x1xf32>
    %83 = math.rsqrt %82 : vector<2x1xf32>
    %84 = vector.broadcast %83 : vector<2x1xf32> to vector<2x32xf32>
    %85 = arith.mulf %75, %84 : vector<2x32xf32>
    %86 = vector.broadcast %5 : vector<1x32xf32> to vector<2x32xf32>
    %87 = arith.mulf %85, %86 : vector<2x32xf32>
    %88 = vector.broadcast %6 : vector<1x32xf32> to vector<2x32xf32>
    %89 = arith.addf %87, %88 : vector<2x32xf32>
    %90 = arith.truncf %89 : vector<2x32xf32> to vector<2x32xbf16>
    %cst_32 = arith.constant dense<0.000000e+00> : vector<2x128xf32>
    %91 = tpu.matmul %90, %12, %cst_32 {dimension_numbers = #tpu.dot_dimension_numbers<[1], [0], [0], [1], [0, 0, 1, 1], [], []>} : vector<2x32xbf16>, vector<32x128xbf16>, vector<2x128xf32> -> vector<2x128xf32>
    %92 = vector.broadcast %8 : vector<1x128xf32> to vector<2x128xf32>
    %93 = arith.addf %91, %92 : vector<2x128xf32>
    %cst_33 = arith.constant 5.000000e-01 : f32
    %94 = vector.broadcast %cst_33 : f32 to vector<2x128xf32>
    %95 = arith.mulf %94, %93 : vector<2x128xf32>
    %cst_34 = arith.constant 0.707106769 : f32
    %96 = vector.broadcast %cst_34 : f32 to vector<2x128xf32>
    %97 = arith.mulf %93, %96 : vector<2x128xf32>
    %cst_35 = arith.constant 0.000000e+00 : f32
    %98 = vector.broadcast %cst_35 : f32 to vector<2x128xf32>
    %99 = arith.cmpf oge, %97, %98 : vector<2x128xf32>
    %cst_36 = arith.constant 1.000000e+00 : f32
    %cst_37 = arith.constant -1.000000e+00 : f32
    %100 = vector.broadcast %cst_36 : f32 to vector<2x128xf32>
    %101 = vector.broadcast %cst_37 : f32 to vector<2x128xf32>
    %102 = arith.select %99, %100, %101 : vector<2x128xi1>, vector<2x128xf32>
    %103 = math.absf %97 : vector<2x128xf32>
    %cst_38 = arith.constant 0.327591091 : f32
    %104 = vector.broadcast %cst_38 : f32 to vector<2x128xf32>
    %105 = arith.mulf %104, %103 : vector<2x128xf32>
    %cst_39 = arith.constant 1.000000e+00 : f32
    %106 = vector.broadcast %cst_39 : f32 to vector<2x128xf32>
    %107 = arith.addf %106, %105 : vector<2x128xf32>
    %108 = tpu.reciprocal %107 {approx = true} : vector<2x128xf32> -> vector<2x128xf32>
    %cst_40 = arith.constant 1.06140542 : f32
    %109 = vector.broadcast %cst_40 : f32 to vector<2x128xf32>
    %110 = arith.mulf %109, %108 : vector<2x128xf32>
    %cst_41 = arith.constant -1.45315206 : f32
    %111 = vector.broadcast %cst_41 : f32 to vector<2x128xf32>
    %112 = arith.addf %110, %111 : vector<2x128xf32>
    %113 = arith.mulf %112, %108 : vector<2x128xf32>
    %cst_42 = arith.constant 1.42141378 : f32
    %114 = vector.broadcast %cst_42 : f32 to vector<2x128xf32>
    %115 = arith.addf %113, %114 : vector<2x128xf32>
    %116 = arith.mulf %115, %108 : vector<2x128xf32>
    %cst_43 = arith.constant -0.284496725 : f32
    %117 = vector.broadcast %cst_43 : f32 to vector<2x128xf32>
    %118 = arith.addf %116, %117 : vector<2x128xf32>
    %119 = arith.mulf %118, %108 : vector<2x128xf32>
    %cst_44 = arith.constant 0.254829586 : f32
    %120 = vector.broadcast %cst_44 : f32 to vector<2x128xf32>
    %121 = arith.addf %119, %120 : vector<2x128xf32>
    %122 = arith.mulf %121, %108 : vector<2x128xf32>
    %cst_45 = arith.constant 0.000000e+00 : f32
    %123 = vector.broadcast %cst_45 : f32 to vector<2x128xf32>
    %124 = arith.subf %123, %103 : vector<2x128xf32>
    %125 = arith.mulf %124, %103 : vector<2x128xf32>
    %126 = math.exp %125 : vector<2x128xf32>
    %127 = arith.mulf %122, %126 : vector<2x128xf32>
    %cst_46 = arith.constant 1.000000e+00 : f32
    %128 = vector.broadcast %cst_46 : f32 to vector<2x128xf32>
    %129 = arith.subf %128, %127 : vector<2x128xf32>
    %130 = arith.mulf %102, %129 : vector<2x128xf32>
    %cst_47 = arith.constant 1.000000e+00 : f32
    %131 = vector.broadcast %cst_47 : f32 to vector<2x128xf32>
    %132 = arith.addf %131, %130 : vector<2x128xf32>
    %133 = arith.mulf %95, %132 : vector<2x128xf32>
    %134 = arith.truncf %133 : vector<2x128xf32> to vector<2x128xbf16>
    %c0_48 = arith.constant 0 : index
    %c0_49 = arith.constant 0 : index
    %135 = vector.load %arg3[%c0_48, %c0_49] : memref<128x32xbf16, #tpu.memory_space<vmem>>, vector<128x32xbf16>
    %cst_50 = arith.constant dense<0.000000e+00> : vector<2x32xf32>
    %136 = tpu.matmul %134, %135, %cst_50 {dimension_numbers = #tpu.dot_dimension_numbers<[1], [0], [0], [1], [0, 0, 1, 1], [], []>} : vector<2x128xbf16>, vector<128x32xbf16>, vector<2x32xf32> -> vector<2x32xf32>
    %137 = vector.broadcast %7 : vector<1x32xf32> to vector<2x32xf32>
    %138 = arith.addf %136, %137 : vector<2x32xf32>
    %139 = arith.addf %69, %138 : vector<2x32xf32>
    %c0_51 = arith.constant 0 : index
    %c0_52 = arith.constant 0 : index
    %140 = vector.load %arg5[%c0_51, %c0_52] : memref<2x32xf32, #tpu.memory_space<vmem>>, vector<2x32xf32>
    tpu.vector_store %arg5[%c0_51, %c0_52], %139 {strides = array<i32>} : memref<2x32xf32, #tpu.memory_space<vmem>>, vector<2x32xf32>,
    return
  }
  func.func @transform_0(%arg0: i32) -> (i32, i32, i32) {
    %c0_i32 = arith.constant 0 : i32
    %c0_i32_0 = arith.constant 0 : i32
    %c0_i32_1 = arith.constant 0 : i32
    %c0_i32_2 = arith.constant 0 : i32
    return %c0_i32, %c0_i32_0, %c0_i32_1 : i32, i32, i32
  }
  func.func @transform_1(%arg0: i32) -> (i32, i32) {
    %c0_i32 = arith.constant 0 : i32
    %c0_i32_0 = arith.constant 0 : i32
    %c0_i32_1 = arith.constant 0 : i32
    return %c0_i32, %c0_i32_0 : i32, i32
  }
  func.func @transform_2(%arg0: i32) -> (i32, i32) {
    %c0_i32 = arith.constant 0 : i32
    %c0_i32_0 = arith.constant 0 : i32
    %c0_i32_1 = arith.constant 0 : i32
    return %c0_i32, %c0_i32_0 : i32, i32
  }
  func.func @transform_3(%arg0: i32) -> (i32, i32) {
    %c0_i32 = arith.constant 0 : i32
    %c0_i32_0 = arith.constant 0 : i32
    %c0_i32_1 = arith.constant 0 : i32
    return %c0_i32, %c0_i32_0 : i32, i32
  }
  func.func @transform_4(%arg0: i32) -> (i32, i32) {
    %c0_i32 = arith.constant 0 : i32
    %c0_i32_0 = arith.constant 0 : i32
    %c0_i32_1 = arith.constant 0 : i32
    return %c0_i32, %c0_i32_0 : i32, i32
  }
}

</mosaic_0001>

<llo_original>
// kernel: tpu_custom_call.1
$region0: #{tpu_custom_call.1}
  #allocation0 [shape = 'u32[]', space=smem, size = 0x4, offset = 0x4, fixed_abs, tag = 'smem constant byte address 0x4 - core index']
  #allocation1 [shape = 'u32[144,128]{1,0:T(1,128)}', space=vmem, size = 0x12000, scoped, tag = 'internal scratch']
  %s0 = inlined_call_operand.vmem [shape: f32[2,8,32], index: 0, kind: input, shape index: {}]
  %s1 = inlined_call_operand.vmem [shape: bf16[32,260], index: 1, kind: input, shape index: {}]
  %s2 = inlined_call_operand.vmem [shape: bf16[128,32], index: 2, kind: input, shape index: {}]
  %s3 = inlined_call_operand.vmem [shape: f32[16,128], index: 3, kind: input, shape index: {}]
  %s4 = inlined_call_operand.hbm [shape: f32[2,32], index: 4, kind: output, shape index: {}]
  %s5 = sld [smem:[#allocation0]]
  $region26: #{tpu_custom_call.1} parent=0
    _
  %s7 = ssub.s32 1, %s5
  %s8 = scalar_select 0, %s7, %s5
  $region1: #{tpu_custom_call.1} parent=0
    #allocation2 [shape = 'u8[1024]{0}', space=vmem, size = 0x400, scoped, tag = 'output window, operand 0, single buffered']
    #allocation3 [shape = 's32[1]{0}', space=sflag, size = 0x4, scoped, tag = 'scoped memory for tpu_custom_call.1']
    %9 = vsyncpa [#allocation3], 0
    // Predicated region
    $region2: #{tpu_custom_call.1} parent=1 // pred_check
      _
    $region3: #{tpu_custom_call.1} parent=1 // pred_check_branch
      %11 = sbr.rel (0) target = $region5
    $region4: #{tpu_custom_call.1} parent=1 // pred_region
      _
    $region5: #{tpu_custom_call.1} parent=1 // pred_fallthru
      _
    // Predicated region
    $region6: #{tpu_custom_call.1} parent=1 // pred_check
      _
    $region7: #{tpu_custom_call.1} parent=1 // pred_check_branch
      %13 = sbr.rel (0) target = $region9
    $region8: #{tpu_custom_call.1} parent=1 // pred_region
      _
    $region9: #{tpu_custom_call.1} parent=1 // pred_fallthru
      _
    // Predicated region
    $region10: #{tpu_custom_call.1} parent=1 // pred_check
      _
    $region11: #{tpu_custom_call.1} parent=1 // pred_check_branch
      %15 = sbr.rel (0) target = $region13
    $region12: #{tpu_custom_call.1} parent=1 // pred_region
      _
    $region13: #{tpu_custom_call.1} parent=1 // pred_fallthru
      _
    // Predicated region
    $region14: #{tpu_custom_call.1} parent=1 // pred_check
      _
    $region15: #{tpu_custom_call.1} parent=1 // pred_check_branch
      %17 = sbr.rel (0) target = $region17
    $region16: #{tpu_custom_call.1} parent=1 // pred_region
      _
    $region17: #{tpu_custom_call.1} parent=1 // pred_fallthru
      _
    %v19 = vld [vmem:[%s0] sm:$0xff]
    %v20 = vld [vmem:[%s0 + $0x8] sm:$0xff]
    %v21 = vld [vmem:[%s3] sm:$0x1]
    %v22 = vld [vmem:[%s3 + $0x1] sm:$0x1]
    %v23 = vld [vmem:[%s3 + $0x2] sm:$0x1]
    %v24 = vld [vmem:[%s3 + $0x3] sm:$0x1]
    %v25 = vld [vmem:[%s3 + $0x4] sm:$0x1]
    %v26 = vld [vmem:[%s3 + $0x5] sm:$0x1]
    %v27 = vld [vmem:[%s3 + $0x6] sm:$0x1]
    %v28 = vld [vmem:[%s3 + $0x8] sm:$0xf]
    %v29 = vld [vmem:[%s1] sm:$0xf]
    %v30 = vld [vmem:[%s1 + $0xc] sm:$0xf]
    %v31 = vld [vmem:[%s1 + $0x18] sm:$0xf]
    %v32 = vld [vmem:[%s1 + $0x24] sm:$0xf]
    %v33 = vld [vmem:[%s1 + $0x4] sm:$0xf]
    %v34 = vld [vmem:[%s1 + $0x10] sm:$0xf]
    %v35 = vld [vmem:[%s1 + $0x1c] sm:$0xf]
    %v36 = vld [vmem:[%s1 + $0x28] sm:$0xf]
    %v37 = vld [vmem:[%s1 + $0x8] sm:$0xf]
    %v38 = vld [vmem:[%s1 + $0x14] sm:$0xf]
    %v39 = vld [vmem:[%s1 + $0x20] sm:$0xf]
    %v40 = vld [vmem:[%s1 + $0x2c] sm:$0xf]
    %v41 = vunpack.c.l.bf16 %v37
    %v42 = vunpack.c.l.bf16 %v38
    %v43 = vunpack.c.l.bf16 %v39
    %v44 = vunpack.c.l.bf16 %v40
    %vm45 = vcmask 261120
    %v46 = vsel %vm45, %v19, 0.0
    %47 = vadd.xlane.f32.xlu0 %v46
    %v48 = vpop.xlane.xlu0 %47
    %v49 = vsel %vm45, %v20, 0.0
    %50 = vadd.xlane.f32.xlu0 %v49
    %v51 = vpop.xlane.xlu0 %50
    %v52 = vrcp.pop 32.0
    %v53 = vmul.f32 %v48, %v52
    %v54 = vmul.f32 %v51, %v52
    %v55 = vsub.f32 %v19, %v53
    %v56 = vsub.f32 %v20, %v54
    %v57 = vmul.f32 %v55, %v55
    %v58 = vmul.f32 %v56, %v56
    %v59 = vsel %vm45, %v57, 0.0
    %60 = vadd.xlane.f32.xlu0 %v59
    %v61 = vpop.xlane.xlu0 %60
    %v62 = vsel %vm45, %v58, 0.0
    %63 = vadd.xlane.f32.xlu0 %v62
    %v64 = vpop.xlane.xlu0 %63
    %v65 = vmul.f32 %v61, %v52
    %v66 = vmul.f32 %v64, %v52
    %v67 = vadd.f32 %v65, 1e-05
    %v68 = vadd.f32 %v66, 1e-05
    %v69 = vrsqrt.pop %v67
    %v70 = vrsqrt.pop %v68
    %v71 = vmul.f32 %v55, %v69
    %v72 = vmul.f32 %v56, %v70
    %v73 = vlaneseq
    %v74 = vshrl.u32 %v73, 7
    %v75 = vsub.s32 0, %v74
    %v76 = vrot.slane %v21, %v75
    %v77 = vmul.f32 %v71, %v76
    %v78 = vmul.f32 %v72, %v76
    %v79 = vlaneseq
    %v80 = vshrl.u32 %v79, 7
    %v81 = vsub.s32 0, %v80
    %v82 = vrot.slane %v22, %v81
    %v83 = vadd.f32 %v77, %v82
    %v84 = vadd.f32 %v78, %v82
    %v85 = vpack.c.bf16 %v84, %v83
    %v90 = vunpack.c.l.b16 %v29
    %v91 = vunpack.c.l.b16 %v30
    %v92 = vunpack.c.l.b16 %v31
    %v93 = vunpack.c.l.b16 %v32
    %v94 = vpack.c.b16 %v91, %v90
    %v95 = vpack.c.b16 %v93, %v92
    %v99 = vsel %vm45, %v85, 0
    %101 = vmatprep.subr.bf16.mxu0 0
    %102 = vmatpush1.bf16.msra.mxu0 0
    %103 = vmatprep.subr.bf16.mxu0 0
    %104 = vmatpush1.bf16.msra.mxu0 0
    %105 = vmatprep.subr.bf16.mxu0 0
    %106 = vmatpush1.bf16.msra.mxu0 0
    %107 = vmatprep.subr.bf16.mxu0 0
    %108 = vmatpush1.bf16.msra.mxu0 0
    %109 = vmatprep.subr.bf16.mxu0 0
    %110 = vmatpush1.bf16.msra.mxu0 0
    %111 = vmatprep.subr.bf16.mxu0 0
    %112 = vmatpush1.bf16.msra.mxu0 0
    %113 = vmatprep.subr.bf16.mxu0 0
    %114 = vmatpush1.bf16.msra.mxu0 %v95
    %115 = vmatprep.subr.bf16.mxu0 0
    %116 = vmatpush1.bf16.msra.mxu0 %v94
    %117 = vmatprep.subr.bf16.mxu0 0
    %118 = vmatpush2.bf16.msra.mxu0 0
    %119 = vmatprep.subr.bf16.mxu0 0
    %120 = vmatpush2.bf16.msra.mxu0 0
    %121 = vmatprep.subr.bf16.mxu0 0
    %122 = vmatpush2.bf16.msra.mxu0 0
    %123 = vmatprep.subr.bf16.mxu0 0
    %124 = vmatpush2.bf16.msra.mxu0 0
    %125 = vmatprep.subr.bf16.mxu0 0
    %126 = vmatpush2.bf16.msra.mxu0 0
    %127 = vmatprep.subr.bf16.mxu0 0
    %128 = vmatpush2.bf16.msra.mxu0 0
    %129 = vmatprep.subr.bf16.mxu0 0
    %130 = vmatpush2.bf16.msra.mxu0 0
    %131 = vmatprep.subr.bf16.mxu0 0
    %132 = vmatpush2.bf16.msra.mxu0 0
    %133 = vmatprep.mubr.bf16.mxu0 0
    %134 = vmatmul.mubr.bf16.gmra.mxu0 %v99
    %v135 = vpop.f32.mrf.mxu0
    %v136 = vadd.f32 0.0, %v135
    %v137 = vpop.f32.mrf.mxu0
    %v138 = vpop.f32.mrf.mxu0
    %v139 = vadd.f32 0.0, %v138
    %v140 = vpop.f32.mrf.mxu0
    %141 = vdwg.mxu0
    %v142 = vlaneseq
    %v143 = vshrl.u32 %v142, 7
    %v144 = vsub.s32 0, %v143
    %v145 = vrot.slane %v136, %v144
    %v146 = vlaneseq
    %v147 = vshrl.u32 %v146, 7
    %v148 = vsub.s32 0, %v147
    %v149 = vrot.slane %v139, %v148
    %152 = vrot.lane.b32.xlu0 %v136, 96
    %v153 = vpop.permute.xlu0 %152
    %154 = vrot.lane.b32.xlu0 %v139, 96
    %v155 = vpop.permute.xlu0 %154
    %v158 = vmul.f32 %v145, %v153
    %v159 = vmul.f32 %v149, %v155
    %v161 = vsel %vm45, %v158, 0
    %v164 = vsel %vm45, %v159, 0
    %166 = vmatprep.subr.mxu0 0.0
    %167 = vmatpush1.msra.mxu0 0.0
    %168 = vmatprep.subr.mxu0 0.0
    %169 = vmatpush1.msra.mxu0 0.0
    %170 = vmatprep.subr.mxu0 0.0
    %171 = vmatpush1.msra.mxu0 0.0
    %172 = vmatprep.subr.mxu0 0.0
    %173 = vmatpush1.msra.mxu0 0.0
    %174 = vmatprep.subr.mxu0 0.0
    %175 = vmatpush1.msra.mxu0 0.0
    %176 = vmatprep.subr.mxu0 0.0
    %177 = vmatpush1.msra.mxu0 0.0
    %178 = vmatprep.subr.mxu0 0.0
    %179 = vmatpush1.msra.mxu0 0.0
    %180 = vmatprep.subr.mxu0 0.0
    %181 = vmatpush1.msra.mxu0 0.0
    %182 = vmatprep.subr.mxu0 0.0
    %183 = vmatpush1.msra.mxu0 0.0
    %184 = vmatprep.subr.mxu0 0.0
    %185 = vmatpush1.msra.mxu0 0.0
    %186 = vmatprep.subr.mxu0 0.0
    %187 = vmatpush1.msra.mxu0 0.0
    %188 = vmatprep.subr.mxu0 0.0
    %189 = vmatpush1.msra.mxu0 0.0
    %190 = vmatprep.subr.mxu0 0.0
    %191 = vmatpush1.msra.mxu0 %v44
    %192 = vmatprep.subr.mxu0 0.0
    %193 = vmatpush1.msra.mxu0 %v43
    %194 = vmatprep.subr.mxu0 0.0
    %195 = vmatpush1.msra.mxu0 %v42
    %196 = vmatprep.subr.mxu0 0.0
    %197 = vmatpush1.msra.mxu0 %v41
    %198 = vmatprep.subr.mxu0 0.0
    %199 = vmatpush2.msra.mxu0 0.0
    %200 = vmatprep.subr.mxu0 0.0
    %201 = vmatpush2.msra.mxu0 0.0
    %202 = vmatprep.subr.mxu0 0.0
    %203 = vmatpush2.msra.mxu0 0.0
    %204 = vmatprep.subr.mxu0 0.0
    %205 = vmatpush2.msra.mxu0 0.0
    %206 = vmatprep.subr.mxu0 0.0
    %207 = vmatpush2.msra.mxu0 0.0
    %208 = vmatprep.subr.mxu0 0.0
    %209 = vmatpush2.msra.mxu0 0.0
    %210 = vmatprep.subr.mxu0 0.0
    %211 = vmatpush2.msra.mxu0 0.0
    %212 = vmatprep.subr.mxu0 0.0
    %213 = vmatpush2.msra.mxu0 0.0
    %214 = vmatprep.subr.mxu0 0.0
    %215 = vmatpush2.msra.mxu0 0.0
    %216 = vmatprep.subr.mxu0 0.0
    %217 = vmatpush2.msra.mxu0 0.0
    %218 = vmatprep.subr.mxu0 0.0
    %219 = vmatpush2.msra.mxu0 0.0
    %220 = vmatprep.subr.mxu0 0.0
    %221 = vmatpush2.msra.mxu0 0.0
    %222 = vmatprep.subr.mxu0 0.0
    %223 = vmatpush2.msra.mxu0 0.0
    %224 = vmatprep.subr.mxu0 0.0
    %225 = vmatpush2.msra.mxu0 0.0
    %226 = vmatprep.subr.mxu0 0.0
    %227 = vmatpush2.msra.mxu0 0.0
    %228 = vmatprep.subr.mxu0 0.0
    %229 = vmatpush2.msra.mxu0 0.0
    %230 = vmatprep.mubr.f32.mxu0 0.0
    %231 = vmatmul.mubr.f32.gmra.mxu0 %v161
    %v232 = vpop.f32.mrf.mxu0
    %v233 = vadd.f32 0.0, %v232
    %v234 = vpop.f32.mrf.mxu0
    %235 = vmatprep.mubr.f32.mxu0 0.0
    %236 = vmatmul.mubr.f32.gmra.mxu0 %v164
    %v237 = vpop.f32.mrf.mxu0
    %v238 = vadd.f32 0.0, %v237
    %v239 = vpop.f32.mrf.mxu0
    %240 = vdwg.mxu0
    %vm241 = vcmask 31744
    %v242 = vsel %vm241, %v233, -inf
    %v243 = vrot.slane %v242, 4
    %v244 = vmax.f32 %v242, %v243
    %v245 = vrot.slane %v244, 2
    %v246 = vmax.f32 %v244, %v245
    %v247 = vrot.slane %v246, 1
    %v248 = vmax.f32 %v246, %v247
    %v249 = vsel %vm241, %v238, -inf
    %v250 = vrot.slane %v249, 4
    %v251 = vmax.f32 %v249, %v250
    %v252 = vrot.slane %v251, 2
    %v253 = vmax.f32 %v251, %v252
    %v254 = vrot.slane %v253, 1
    %v255 = vmax.f32 %v253, %v254
    %v256 = vsub.f32 %v233, %v248
    %v257 = vsub.f32 %v238, %v255
    %v258 = vmul.f32 %v256, 1.442695
    %v259 = vpow.pop %v258
    %v260 = vmul.f32 %v257, 1.442695
    %v261 = vpow.pop %v260
    %v262 = vsel %vm241, %v259, 0.0
    %v263 = vrot.slane %v262, 4
    %v264 = vadd.f32 %v262, %v263
    %v265 = vrot.slane %v264, 2
    %v266 = vadd.f32 %v264, %v265
    %v267 = vrot.slane %v266, 1
    %v268 = vadd.f32 %v266, %v267
    %v269 = vsel %vm241, %v261, 0.0
    %v270 = vrot.slane %v269, 4
    %v271 = vadd.f32 %v269, %v270
    %v272 = vrot.slane %v271, 2
    %v273 = vadd.f32 %v271, %v272
    %v274 = vrot.slane %v273, 1
    %v275 = vadd.f32 %v273, %v274
    %v276 = vrcp.pop %v268
    %v277 = vrcp.pop %v275
    %v278 = vmul.f32 %v259, %v276
    %v279 = vmul.f32 %v261, %v277
    %v281 = vsel %vm241, %v278, 0
    %v284 = vsel %vm241, %v279, 0
    %vm286 = vcmask 1043456
    %v288 = vsel %vm286, %v28, 0
    %290 = vmatprep.subr.mxu0 0.0
    %291 = vmatpush1.msra.mxu0 0.0
    %292 = vmatprep.subr.mxu0 0.0
    %293 = vmatpush1.msra.mxu0 0.0
    %294 = vmatprep.subr.mxu0 0.0
    %295 = vmatpush1.msra.mxu0 0.0
    %296 = vmatprep.subr.mxu0 0.0
    %297 = vmatpush1.msra.mxu0 0.0
    %298 = vmatprep.subr.mxu0 0.0
    %299 = vmatpush1.msra.mxu0 0.0
    %300 = vmatprep.subr.mxu0 0.0
    %301 = vmatpush1.msra.mxu0 0.0
    %302 = vmatprep.subr.mxu0 0.0
    %303 = vmatpush1.msra.mxu0 0.0
    %304 = vmatprep.subr.mxu0 0.0
    %305 = vmatpush1.msra.mxu0 0.0
    %306 = vmatprep.subr.mxu0 0.0
    %307 = vmatpush1.msra.mxu0 0.0
    %308 = vmatprep.subr.mxu0 0.0
    %309 = vmatpush1.msra.mxu0 0.0
    %310 = vmatprep.subr.mxu0 0.0
    %311 = vmatpush1.msra.mxu0 0.0
    %312 = vmatprep.subr.mxu0 0.0
    %313 = vmatpush1.msra.mxu0 0.0
    %314 = vmatprep.subr.mxu0 0.0
    %315 = vmatpush1.msra.mxu0 0.0
    %316 = vmatprep.subr.mxu0 0.0
    %317 = vmatpush1.msra.mxu0 0.0
    %318 = vmatprep.subr.mxu0 0.0
    %319 = vmatpush1.msra.mxu0 0.0
    %320 = vmatprep.subr.mxu0 0.0
    %321 = vmatpush1.msra.mxu0 %v288
    %322 = vmatprep.subr.mxu0 0.0
    %323 = vmatpush2.msra.mxu0 0.0
    %324 = vmatprep.subr.mxu0 0.0
    %325 = vmatpush2.msra.mxu0 0.0
    %326 = vmatprep.subr.mxu0 0.0
    %327 = vmatpush2.msra.mxu0 0.0
    %328 = vmatprep.subr.mxu0 0.0
    %329 = vmatpush2.msra.mxu0 0.0
    %330 = vmatprep.subr.mxu0 0.0
    %331 = vmatpush2.msra.mxu0 0.0
    %332 = vmatprep.subr.mxu0 0.0
    %333 = vmatpush2.msra.mxu0 0.0
    %334 = vmatprep.subr.mxu0 0.0
    %335 = vmatpush2.msra.mxu0 0.0
    %336 = vmatprep.subr.mxu0 0.0
    %337 = vmatpush2.msra.mxu0 0.0
    %338 = vmatprep.subr.mxu0 0.0
    %339 = vmatpush2.msra.mxu0 0.0
    %340 = vmatprep.subr.mxu0 0.0
    %341 = vmatpush2.msra.mxu0 0.0
    %342 = vmatprep.subr.mxu0 0.0
    %343 = vmatpush2.msra.mxu0 0.0
    %344 = vmatprep.subr.mxu0 0.0
    %345 = vmatpush2.msra.mxu0 0.0
    %346 = vmatprep.subr.mxu0 0.0
    %347 = vmatpush2.msra.mxu0 0.0
    %348 = vmatprep.subr.mxu0 0.0
    %349 = vmatpush2.msra.mxu0 0.0
    %350 = vmatprep.subr.mxu0 0.0
    %351 = vmatpush2.msra.mxu0 0.0
    %352 = vmatprep.subr.mxu0 0.0
    %353 = vmatpush2.msra.mxu0 0.0
    %354 = vmatprep.mubr.f32.mxu0 0.0
    %355 = vmatmul.mubr.f32.gmra.mxu0 %v281
    %v356 = vpop.f32.mrf.mxu0
    %v357 = vadd.f32 0.0, %v356
    %v358 = vpop.f32.mrf.mxu0
    %359 = vmatprep.mubr.f32.mxu0 0.0
    %360 = vmatmul.mubr.f32.gmra.mxu0 %v284
    %v361 = vpop.f32.mrf.mxu0
    %v362 = vadd.f32 0.0, %v361
    %v363 = vpop.f32.mrf.mxu0
    %364 = vdwg.mxu0
    %365 = vrot.lane.b32.xlu0 %v136, 64
    %v366 = vpop.permute.xlu0 %365
    %367 = vrot.lane.b32.xlu0 %v139, 64
    %v368 = vpop.permute.xlu0 %367
    %v371 = vmul.f32 %v357, %v366
    %v372 = vmul.f32 %v362, %v368
    %v373 = vsel %vm45, %v371, 0.0
    %v374 = vrot.slane %v373, 4
    %v375 = vadd.f32 %v373, %v374
    %v376 = vrot.slane %v375, 2
    %v377 = vadd.f32 %v375, %v376
    %v378 = vrot.slane %v377, 1
    %v379 = vadd.f32 %v377, %v378
    %v380 = vsel %vm45, %v372, 0.0
    %v381 = vrot.slane %v380, 4
    %v382 = vadd.f32 %v380, %v381
    %v383 = vrot.slane %v382, 2
    %v384 = vadd.f32 %v382, %v383
    %v385 = vrot.slane %v384, 1
    %v386 = vadd.f32 %v384, %v385
    %v387 = vpack.c.bf16 %v379, %v379
    %v388 = vpack.c.bf16 %v386, %v386
    %v389 = vlaneseq
    %v390 = vshrl.u32 %v389, 7
    %v391 = vsub.s32 0, %v390
    %v392 = vrot.slane %v23, %v391
    %v395 = vunpack.c.l.b16 %v387
    %v396 = vunpack.c.l.b16 %v388
    %vm397 = vcmask 1041409
    %v398 = vsel %vm397, %v396, %v395
    %v399 = vpack.c.b16 %v398, %v398
    %400 = vrot.lane.b32.xlu0 %v94, 32
    %v401 = vpop.permute.xlu0 %400
    %402 = vrot.lane.b32.xlu0 %v95, 32
    %v403 = vpop.permute.xlu0 %402
    %v407 = vsel %vm45, %v399, 0
    %409 = vmatprep.subr.bf16.mxu0 0
    %410 = vmatpush1.bf16.msra.mxu0 0
    %411 = vmatprep.subr.bf16.mxu0 0
    %412 = vmatpush1.bf16.msra.mxu0 0
    %413 = vmatprep.subr.bf16.mxu0 0
    %414 = vmatpush1.bf16.msra.mxu0 0
    %415 = vmatprep.subr.bf16.mxu0 0
    %416 = vmatpush1.bf16.msra.mxu0 0
    %417 = vmatprep.subr.bf16.mxu0 0
    %418 = vmatpush1.bf16.msra.mxu0 0
    %419 = vmatprep.subr.bf16.mxu0 0
    %420 = vmatpush1.bf16.msra.mxu0 0
    %421 = vmatprep.subr.bf16.mxu0 0
    %422 = vmatpush1.bf16.msra.mxu0 %v403
    %423 = vmatprep.subr.bf16.mxu0 0
    %424 = vmatpush1.bf16.msra.mxu0 %v401
    %425 = vmatprep.subr.bf16.mxu0 0
    %426 = vmatpush2.bf16.msra.mxu0 0
    %427 = vmatprep.subr.bf16.mxu0 0
    %428 = vmatpush2.bf16.msra.mxu0 0
    %429 = vmatprep.subr.bf16.mxu0 0
    %430 = vmatpush2.bf16.msra.mxu0 0
    %431 = vmatprep.subr.bf16.mxu0 0
    %432 = vmatpush2.bf16.msra.mxu0 0
    %433 = vmatprep.subr.bf16.mxu0 0
    %434 = vmatpush2.bf16.msra.mxu0 0
    %435 = vmatprep.subr.bf16.mxu0 0
    %436 = vmatpush2.bf16.msra.mxu0 0
    %437 = vmatprep.subr.bf16.mxu0 0
    %438 = vmatpush2.bf16.msra.mxu0 0
    %439 = vmatprep.subr.bf16.mxu0 0
    %440 = vmatpush2.bf16.msra.mxu0 0
    %441 = vmatprep.mubr.bf16.mxu0 0
    %442 = vmatmul.mubr.bf16.gmra.mxu0 %v407
    %v443 = vpop.f32.mrf.mxu0
    %v444 = vadd.f32 %v392, %v443
    %v445 = vpop.f32.mrf.mxu0
    %v446 = vpop.f32.mrf.mxu0
    %v447 = vpop.f32.mrf.mxu0
    %448 = vdwg.mxu0
    %v450 = vrot.slane %v444, 1
    %v453 = vadd.f32 %v19, %v444
    %v454 = vadd.f32 %v20, %v450
    %v457 = vrot.slane %v454, 7
    %v458 = vsel %vm397, %v457, %v453
    %vm460 = vcmask 254976
    %v461 = vsel %vm460, %v458, 0.0
    %462 = vadd.xlane.f32.xlu0 %v461
    %v463 = vpop.xlane.xlu0 %462
    %v464 = vmul.f32 %v463, %v52
    %v466 = vrot.slane %v464, 1
    %v469 = vsub.f32 %v453, %v464
    %v470 = vsub.f32 %v454, %v466
    %v471 = vmul.f32 %v469, %v469
    %v472 = vmul.f32 %v470, %v470
    %v475 = vrot.slane %v472, 7
    %v476 = vsel %vm397, %v475, %v471
    %v478 = vsel %vm460, %v476, 0.0
    %479 = vadd.xlane.f32.xlu0 %v478
    %v480 = vpop.xlane.xlu0 %479
    %v481 = vmul.f32 %v480, %v52
    %v482 = vadd.f32 %v481, 1e-05
    %v483 = vrsqrt.pop %v482
    %v485 = vrot.slane %v483, 1
    %v488 = vmul.f32 %v469, %v483
    %v489 = vmul.f32 %v470, %v485
    %v490 = vlaneseq
    %v491 = vshrl.u32 %v490, 7
    %v492 = vsub.s32 0, %v491
    %v493 = vrot.slane %v24, %v492
    %v494 = vmul.f32 %v488, %v493
    %v495 = vmul.f32 %v489, %v493
    %v496 = vlaneseq
    %v497 = vshrl.u32 %v496, 7
    %v498 = vsub.s32 0, %v497
    %v499 = vrot.slane %v25, %v498
    %v500 = vadd.f32 %v494, %v499
    %v501 = vadd.f32 %v495, %v499
    %v502 = vpack.c.bf16 %v500, %v500
    %v503 = vpack.c.bf16 %v501, %v501
    %v504 = vlaneseq
    %v505 = vshrl.u32 %v504, 7
    %v506 = vsub.s32 0, %v505
    %v507 = vrot.slane %v27, %v506
    %v510 = vunpack.c.l.b16 %v502
    %v511 = vunpack.c.l.b16 %v503
    %v512 = vrot.slane %v511, 7
    %v513 = vsel %vm397, %v512, %v510
    %v514 = vpack.c.b16 %v513, %v513
    %v519 = vunpack.c.l.b16 %v33
    %v520 = vunpack.c.l.b16 %v34
    %v521 = vunpack.c.l.b16 %v35
    %v522 = vunpack.c.l.b16 %v36
    %v523 = vpack.c.b16 %v520, %v519
    %v524 = vpack.c.b16 %v522, %v521
    %v528 = vsel %vm45, %v514, 0
    %530 = vmatprep.subr.bf16.mxu0 0
    %531 = vmatpush1.bf16.msra.mxu0 0
    %532 = vmatprep.subr.bf16.mxu0 0
    %533 = vmatpush1.bf16.msra.mxu0 0
    %534 = vmatprep.subr.bf16.mxu0 0
    %535 = vmatpush1.bf16.msra.mxu0 0
    %536 = vmatprep.subr.bf16.mxu0 0
    %537 = vmatpush1.bf16.msra.mxu0 0
    %538 = vmatprep.subr.bf16.mxu0 0
    %539 = vmatpush1.bf16.msra.mxu0 0
    %540 = vmatprep.subr.bf16.mxu0 0
    %541 = vmatpush1.bf16.msra.mxu0 0
    %542 = vmatprep.subr.bf16.mxu0 0
    %543 = vmatpush1.bf16.msra.mxu0 %v524
    %544 = vmatprep.subr.bf16.mxu0 0
    %545 = vmatpush1.bf16.msra.mxu0 %v523
    %546 = vmatprep.subr.bf16.mxu0 0
    %547 = vmatpush2.bf16.msra.mxu0 0
    %548 = vmatprep.subr.bf16.mxu0 0
    %549 = vmatpush2.bf16.msra.mxu0 0
    %550 = vmatprep.subr.bf16.mxu0 0
    %551 = vmatpush2.bf16.msra.mxu0 0
    %552 = vmatprep.subr.bf16.mxu0 0
    %553 = vmatpush2.bf16.msra.mxu0 0
    %554 = vmatprep.subr.bf16.mxu0 0
    %555 = vmatpush2.bf16.msra.mxu0 0
    %556 = vmatprep.subr.bf16.mxu0 0
    %557 = vmatpush2.bf16.msra.mxu0 0
    %558 = vmatprep.subr.bf16.mxu0 0
    %559 = vmatpush2.bf16.msra.mxu0 0
    %560 = vmatprep.subr.bf16.mxu0 0
    %561 = vmatpush2.bf16.msra.mxu0 0
    %562 = vmatprep.mubr.bf16.mxu0 0
    %563 = vmatmul.mubr.bf16.gmra.mxu0 %v528
    %v564 = vpop.f32.mrf.mxu0
    %v565 = vadd.f32 %v507, %v564
    %v566 = vpop.f32.mrf.mxu0
    %v567 = vpop.f32.mrf.mxu0
    %v568 = vpop.f32.mrf.mxu0
    %569 = vdwg.mxu0
    %v570 = vmul.f32 %v565, 0.5
    %v571 = vmul.f32 %v565, 0.70710677
    %vm572 = vcmp.ge.f32.partialorder %v571, 0.0
    %v573 = vsel %vm572, 1.0, -1.0
    %v574 = vand.u32 2147483647, %v571
    %v575 = vmul.f32 %v574, 0.3275911
    %v576 = vadd.f32 %v575, 1.0
    %v577 = vrcp.pop %v576
    %v578 = vmul.f32 %v577, 1.0614054
    %v579 = vadd.f32 %v578, -1.4531521
    %v580 = vmul.f32 %v579, %v577
    %v581 = vadd.f32 %v580, 1.4214138
    %v582 = vmul.f32 %v581, %v577
    %v583 = vadd.f32 %v582, -0.28449672
    %v584 = vmul.f32 %v583, %v577
    %v585 = vadd.f32 %v584, 0.2548296
    %v586 = vmul.f32 %v585, %v577
    %v587 = vsub.f32 0.0, %v574
    %v588 = vmul.f32 %v587, %v574
    %v589 = vmul.f32 %v588, 1.442695
    %v590 = vpow.pop %v589
    %v591 = vmul.f32 %v586, %v590
    %v592 = vsub.f32 1.0, %v591
    %v593 = vmul.f32 %v573, %v592
    %v594 = vadd.f32 %v593, 1.0
    %v595 = vmul.f32 %v570, %v594
    %v596 = vpack.c.bf16 %v595, %v595
    %v597 = vld [vmem:[%s2] sm:$0xf]
    %v598 = vld [vmem:[%s2 + $0x4] sm:$0xf]
    %v599 = vld [vmem:[%s2 + $0x8] sm:$0xf]
    %v600 = vld [vmem:[%s2 + $0xc] sm:$0xf]
    %v601 = vld [vmem:[%s2 + $0x10] sm:$0xf]
    %v602 = vld [vmem:[%s2 + $0x14] sm:$0xf]
    %v603 = vld [vmem:[%s2 + $0x18] sm:$0xf]
    %v604 = vld [vmem:[%s2 + $0x1c] sm:$0xf]
    %v605 = vld [vmem:[%s2 + $0x20] sm:$0xf]
    %v606 = vld [vmem:[%s2 + $0x24] sm:$0xf]
    %v607 = vld [vmem:[%s2 + $0x28] sm:$0xf]
    %v608 = vld [vmem:[%s2 + $0x2c] sm:$0xf]
    %v609 = vld [vmem:[%s2 + $0x30] sm:$0xf]
    %v610 = vld [vmem:[%s2 + $0x34] sm:$0xf]
    %v611 = vld [vmem:[%s2 + $0x38] sm:$0xf]
    %v612 = vld [vmem:[%s2 + $0x3c] sm:$0xf]
    %v613 = vlaneseq
    %v614 = vshrl.u32 %v613, 7
    %v615 = vsub.s32 0, %v614
    %v616 = vrot.slane %v26, %v615
    %v633 = vunpack.c.l.b16 %v597
    %v634 = vunpack.c.l.b16 %v598
    %v635 = vunpack.c.l.b16 %v599
    %v636 = vunpack.c.l.b16 %v600
    %v637 = vunpack.c.l.b16 %v601
    %v638 = vunpack.c.l.b16 %v602
    %v639 = vunpack.c.l.b16 %v603
    %v640 = vunpack.c.l.b16 %v604
    %v641 = vunpack.c.l.b16 %v605
    %v642 = vunpack.c.l.b16 %v606
    %v643 = vunpack.c.l.b16 %v607
    %v644 = vunpack.c.l.b16 %v608
    %v645 = vunpack.c.l.b16 %v609
    %v646 = vunpack.c.l.b16 %v610
    %v647 = vunpack.c.l.b16 %v611
    %v648 = vunpack.c.l.b16 %v612
    %v649 = vpack.c.b16 %v634, %v633
    %v650 = vpack.c.b16 %v636, %v635
    %v651 = vpack.c.b16 %v638, %v637
    %v652 = vpack.c.b16 %v640, %v639
    %v653 = vpack.c.b16 %v642, %v641
    %v654 = vpack.c.b16 %v644, %v643
    %v655 = vpack.c.b16 %v646, %v645
    %v656 = vpack.c.b16 %v648, %v647
    %665 = vmatprep.subr.bf16.mxu0 0
    %666 = vmatpush1.bf16.msra.mxu0 %v656
    %667 = vmatprep.subr.bf16.mxu0 0
    %668 = vmatpush1.bf16.msra.mxu0 %v655
    %669 = vmatprep.subr.bf16.mxu0 0
    %670 = vmatpush1.bf16.msra.mxu0 %v654
    %671 = vmatprep.subr.bf16.mxu0 0
    %672 = vmatpush1.bf16.msra.mxu0 %v653
    %673 = vmatprep.subr.bf16.mxu0 0
    %674 = vmatpush1.bf16.msra.mxu0 %v652
    %675 = vmatprep.subr.bf16.mxu0 0
    %676 = vmatpush1.bf16.msra.mxu0 %v651
    %677 = vmatprep.subr.bf16.mxu0 0
    %678 = vmatpush1.bf16.msra.mxu0 %v650
    %679 = vmatprep.subr.bf16.mxu0 0
    %680 = vmatpush1.bf16.msra.mxu0 %v649
    %681 = vmatprep.subr.bf16.mxu0 0
    %682 = vmatpush2.bf16.msra.mxu0 0
    %683 = vmatprep.subr.bf16.mxu0 0
    %684 = vmatpush2.bf16.msra.mxu0 0
    %685 = vmatprep.subr.bf16.mxu0 0
    %686 = vmatpush2.bf16.msra.mxu0 0
    %687 = vmatprep.subr.bf16.mxu0 0
    %688 = vmatpush2.bf16.msra.mxu0 0
    %689 = vmatprep.subr.bf16.mxu0 0
    %690 = vmatpush2.bf16.msra.mxu0 0
    %691 = vmatprep.subr.bf16.mxu0 0
    %692 = vmatpush2.bf16.msra.mxu0 0
    %693 = vmatprep.subr.bf16.mxu0 0
    %694 = vmatpush2.bf16.msra.mxu0 0
    %695 = vmatprep.subr.bf16.mxu0 0
    %696 = vmatpush2.bf16.msra.mxu0 0
    %697 = vmatprep.mubr.bf16.mxu0 0
    %698 = vmatmul.mubr.bf16.gmra.mxu0 %v596
    %v699 = vpop.f32.mrf.mxu0
    %v700 = vadd.f32 %v616, %v699
    %v701 = vpop.f32.mrf.mxu0
    %v702 = vpop.f32.mrf.mxu0
    %v703 = vpop.f32.mrf.mxu0
    %704 = vdwg.mxu0
    %v706 = vrot.slane %v700, 1
    %v709 = vadd.f32 %v453, %v700
    %v710 = vadd.f32 %v454, %v706
    %v713 = vrot.slane %v710, 7
    %v714 = vsel %vm397, %v713, %v709
    %716 = vst.msk [vmem:[#allocation2] sm:$0x3] %vm460, %v714
    // Predicated region
    $region18: #{tpu_custom_call.1} parent=1 // pred_check
      _
    $region19: #{tpu_custom_call.1} parent=1 // pred_check_branch
      %718 = sbr.rel (0) target = $region21
    $region20: #{tpu_custom_call.1} parent=1 // pred_region
      %s720 = ssub.s32 32, 32
      %721 = vsyncadd [#allocation3], %s720
      %s723 = sshll.u32 [#allocation2], 4
      %s724 = int_to_ptr.vmem [resolvable:$true] %s723
      %726 = dma.vmem_to_hbm [thread:$0]  %s724, 32, %s4, [#allocation3]
    $region21: #{tpu_custom_call.1} parent=1 // pred_fallthru
      _
    // Predicated region
    $region22: #{tpu_custom_call.1} parent=1 // pred_check
      _
    $region23: #{tpu_custom_call.1} parent=1 // pred_check_branch
      %728 = sbr.rel (0) target = $region25
    $region24: #{tpu_custom_call.1} parent=1 // pred_region
      %729 = dma.done [#allocation3], 32
    $region25: #{tpu_custom_call.1} parent=1 // pred_fallthru
      _
    %730 = vsyncpa [#allocation3], 1

</llo_original>
